<compile_context>
chip_gen: v6e
topology: v6e:2x2x1
jax: 0.10.0
libtpu: 0.0.40
codegen_flags: <defaults>
</compile_context>

<pallas_src>
import functools

import jax
import jax.numpy as jnp
from jax import lax
from jax.experimental import pallas as pl
from jax.experimental.pallas import tpu as pltpu

_LANE = 128
# Per-input, per-pipeline-buffer tile budget (bytes, in the input dtype).
_TILE_BYTES = 8 * 1024 * 1024


def _pick_tile_hw(c, flat, itemsize):
    """Largest lane-aligned tile of the flat (H*W) axis within the VMEM budget."""
    cap = max(_LANE, (_TILE_BYTES // (itemsize * c)) // _LANE * _LANE)
    flat_up = pl.cdiv(flat, _LANE) * _LANE
    return min(flat_up, cap)


def _vmem_limit_bytes():
    """Generation-aware scoped-VMEM limit with headroom below physical VMEM."""
    cap = 64 * 1024 * 1024  # conservative fallback (v7x physical)
    try:
        info = pltpu.get_tpu_info()
        cap = int(getattr(info, "vmem_capacity_bytes", cap) or cap)
    except Exception:
        pass
    # ~96 MiB on 128-MiB parts (v5e/v6e), ~48 MiB on 64-MiB parts (v7x).
    return int(min(cap * 3 // 4, 96 * 1024 * 1024))


def _partials_kernel(x_ref, t_ref, o_ref, tp_acc, sx_acc, st_acc, *, rem):
    """Per-batch streaming partials: o_ref[c, :] = (tp[c], sum_x[c], sum_t[c])."""
    j = pl.program_id(1)
    nj = pl.num_programs(1)

    @pl.when(j == 0)
    def _init():
        tp_acc[...] = jnp.zeros_like(tp_acc)
        sx_acc[...] = jnp.zeros_like(sx_acc)
        st_acc[...] = jnp.zeros_like(st_acc)

    # (C, TILE) tile; up-cast so bf16/int inputs accumulate in f32.
    x = x_ref[...].astype(jnp.float32)
    t = t_ref[...].astype(jnp.float32)

    if rem:
        # Non-dividing flat axis: the OOB part of the tail block is undefined
        # and MUST be zeroed before the sums.
        limit = jnp.where(j == nj - 1, rem, x.shape[1])
        lane = lax.broadcasted_iota(jnp.int32, x.shape, 1)
        valid = lane < limit
        x = jnp.where(valid, x, 0.0)
        t = jnp.where(valid, t, 0.0)

    # Intra-tile reduce: bulk is elementwise vreg adds (VALU), one cross-lane
    # fold (XLU) per quantity per tile — negligible next to the DMA stream.
    tp_acc[...] += jnp.sum(x * t, axis=1, keepdims=True)   # per-channel tp
    sx_acc[...] += jnp.sum(x, axis=1, keepdims=True)        # per-channel sum(x)
    st_acc[...] += jnp.sum(t, axis=1, keepdims=True)        # per-channel sum(t)

    @pl.when(j == nj - 1)
    def _write():
        o_ref[:, 0:1] = tp_acc[...]
        o_ref[:, 1:2] = sx_acc[...]
        o_ref[:, 2:3] = st_acc[...]


def focal_tversky_loss(inputs, target, alpha=0.3, beta=0.7, gamma=3.0 / 4.0,
                       reduction="mean", tile_hw=None):
    """FocalTverskyLoss forward for NCHW inputs/target (PyTorch semantics)."""
    N, C, H, W = inputs.shape
    flat = H * W
    # Free, contiguous reshape — no HBM transpose, no padding copies.
    x = inputs.reshape(N, C, flat)
    t = target.reshape(N, C, flat)

    itemsize = max(x.dtype.itemsize, t.dtype.itemsize)
    tile = int(tile_hw) if tile_hw is not None else _pick_tile_hw(C, flat, itemsize)
    n_tiles = pl.cdiv(flat, tile)
    rem = flat % tile  # 0 => every block is fully in-bounds (no masking needed)

    kernel = functools.partial(_partials_kernel, rem=rem)

    bytes_in = x.size * x.dtype.itemsize + t.size * t.dtype.itemsize
    cost = pl.CostEstimate(
        flops=4 * N * C * flat,
        transcendentals=0,
        bytes_accessed=bytes_in + N * C * 3 * 4,
    )

    partials = pl.pallas_call(
        kernel,
        out_shape=jax.ShapeDtypeStruct((N, C, 3), jnp.float32),
        grid_spec=pltpu.PrefetchScalarGridSpec(
            num_scalar_prefetch=0,
            grid=(N, n_tiles),
            in_specs=[
                pl.BlockSpec((None, C, tile), lambda n, j: (n, 0, j)),
                pl.BlockSpec((None, C, tile), lambda n, j: (n, 0, j)),
            ],
            out_specs=pl.BlockSpec((None, C, 3), lambda n, j: (n, 0, 0)),
            scratch_shapes=[
                pltpu.VMEM((C, 1), jnp.float32),   # tp accumulator
                pltpu.VMEM((C, 1), jnp.float32),   # sum(x) accumulator
                pltpu.VMEM((C, 1), jnp.float32),   # sum(t) accumulator
            ],
        ),
        compiler_params=pltpu.CompilerParams(
            # Batch axis parallel => sharded across the 2 TensorCores on v7x
            # (safe: no cross-batch shared state in the kernel).
            dimension_semantics=("parallel", "arbitrary"),
            vmem_limit_bytes=_vmem_limit_bytes(),
        ),
        cost_estimate=cost,
    )(x, t)

    # Tiny finalize in plain JAX (matches the PyTorch module exactly).
    smooth = jnp.float32(1e-5)
    tp = jnp.sum(partials[:, :, 0], axis=0)           # (C,) per-channel tp
    total_x = jnp.sum(partials[:, :, 1])               # scalar sum(inputs)
    total_t = jnp.sum(partials[:, :, 2])               # scalar sum(target)
    fp = total_x - tp
    fn = total_t - tp
    tversky = (2.0 * tp + smooth) / (2.0 * tp + alpha * fp + beta * fn + smooth)
    loss = jnp.power(1.0 - tversky, jnp.float32(gamma))
    if reduction == "mean":
        return jnp.mean(loss)
    elif reduction == "sum":
        return jnp.sum(loss)
    return loss


def _reference_loss(inputs, target, alpha=0.3, beta=0.7, gamma=3.0 / 4.0):
    smooth = 1e-5
    x = inputs.astype(jnp.float32)
    t = target.astype(jnp.float32)
    tp = jnp.sum(x * t, axis=(0, 2, 3))
    fp = jnp.sum(x) - tp
    fn = jnp.sum(t) - tp
    tversky = (2 * tp + smooth) / (2 * tp + alpha * fp + beta * fn + smooth)
    loss = jnp.power(1 - tversky, gamma)
    return jnp.mean(loss)


if __name__ == "__main__":
    key = jax.random.PRNGKey(0)
    k1, k2, k3, k4 = jax.random.split(key, 4)

    # Small NCHW shapes: batch=2, channels=4, spatial=16x16.
    inputs = jax.nn.sigmoid(jax.random.normal(k1, (2, 4, 16, 16), jnp.float32))
    target = (jax.random.uniform(k2, (2, 4, 16, 16)) > 0.5).astype(jnp.float32)

    ref = jax.block_until_ready(_reference_loss(inputs, target))

    # Default path: one full block per batch sample.
    loss = jax.block_until_ready(focal_tversky_loss(inputs, target))
    assert jnp.allclose(loss, ref, rtol=1e-5, atol=1e-6), (loss, ref)

    # Multi-tile accumulation path: grid = (2 batch, 2 flat tiles), rem == 0.
    loss_tiled = jax.block_until_ready(
        focal_tversky_loss(inputs, target, tile_hw=128))
    assert jnp.allclose(loss_tiled, ref, rtol=1e-5, atol=1e-6), (loss_tiled, ref)

    # Non-dividing flat axis (16x20 -> 320, tile 128): masked tail block.
    inputs2 = jax.nn.sigmoid(jax.random.normal(k3, (2, 4, 16, 20), jnp.float32))
    target2 = (jax.random.uniform(k4, (2, 4, 16, 20)) > 0.5).astype(jnp.float32)
    ref2 = jax.block_until_ready(_reference_loss(inputs2, target2))
    loss2 = jax.block_until_ready(
        focal_tversky_loss(inputs2, target2, tile_hw=128))
    assert jnp.allclose(loss2, ref2, rtol=1e-5, atol=1e-6), (loss2, ref2)

    # Single oversized block (flat=100 < tile=128): OOB lanes fully masked.
    inputs3 = jax.nn.sigmoid(jax.random.normal(k3, (2, 4, 10, 10), jnp.float32))
    target3 = (jax.random.uniform(k4, (2, 4, 10, 10)) > 0.5).astype(jnp.float32)
    ref3 = jax.block_until_ready(_reference_loss(inputs3, target3))
    loss3 = jax.block_until_ready(focal_tversky_loss(inputs3, target3))
    assert jnp.allclose(loss3, ref3, rtol=1e-5, atol=1e-6), (loss3, ref3)

    # bf16 operands stay bf16 in HBM; kernel up-casts internally.
    loss_bf16 = jax.block_until_ready(
        focal_tversky_loss(inputs.astype(jnp.bfloat16),
                           target.astype(jnp.bfloat16)))
    assert jnp.allclose(loss_bf16, ref, rtol=2e-2, atol=2e-2), (loss_bf16, ref)

    print("KERNEL_OK")
</pallas_src>

<mosaic_0001>
module attributes {stable_mosaic.version = 11 : i64} {
  func.func @_partials_kernel(%arg0: i32, %arg1: i32, %arg2: memref<1x4x256xf32, #tpu.memory_space<vmem>>, %arg3: memref<1x4x256xf32, #tpu.memory_space<vmem>>, %arg4: memref<1x4x3xf32, #tpu.memory_space<vmem>>, %arg5: memref<4x1xf32, #tpu.memory_space<vmem>>, %arg6: memref<4x1xf32, #tpu.memory_space<vmem>>, %arg7: memref<4x1xf32, #tpu.memory_space<vmem>>) attributes {dimension_semantics = [#tpu.dimension_semantics<parallel>, #tpu.dimension_semantics<arbitrary>], iteration_bounds = array<i64: 2, 1>, scalar_prefetch = 0 : i64, scratch_operands = 3 : i64, tpu.core_type = #tpu.core_type<tc>, window_params = [{transform_indices = @transform_0, window_bounds = array<i64: 1, 4, 256>}, {transform_indices = @transform_1, window_bounds = array<i64: 1, 4, 256>}, {transform_indices = @transform_2, window_bounds = array<i64: 1, 4, 3>}]} {
    %c0_i32 = arith.constant 0 : i32
    %0 = arith.cmpi eq, %arg1, %c0_i32 : i32
    %1 = arith.extui %0 : i1 to i32
    %c0_i32_0 = arith.constant 0 : i32
    %2 = arith.cmpi ne, %1, %c0_i32_0 : i32
    scf.if %2 {
      %cst_22 = arith.constant 0.000000e+00 : f32
      %26 = vector.broadcast %cst_22 : f32 to vector<4x1xf32>
      %c0_23 = arith.constant 0 : index
      %c0_24 = arith.constant 0 : index
      %27 = vector.load %arg5[%c0_23, %c0_24] : memref<4x1xf32, #tpu.memory_space<vmem>>, vector<4x1xf32>
      tpu.vector_store %arg5[%c0_23, %c0_24], %26 {strides = array<i32>} : memref<4x1xf32, #tpu.memory_space<vmem>>, vector<4x1xf32>,
      %cst_25 = arith.constant 0.000000e+00 : f32
      %28 = vector.broadcast %cst_25 : f32 to vector<4x1xf32>
      %c0_26 = arith.constant 0 : index
      %c0_27 = arith.constant 0 : index
      %29 = vector.load %arg6[%c0_26, %c0_27] : memref<4x1xf32, #tpu.memory_space<vmem>>, vector<4x1xf32>
      tpu.vector_store %arg6[%c0_26, %c0_27], %28 {strides = array<i32>} : memref<4x1xf32, #tpu.memory_space<vmem>>, vector<4x1xf32>,
      %cst_28 = arith.constant 0.000000e+00 : f32
      %30 = vector.broadcast %cst_28 : f32 to vector<4x1xf32>
      %c0_29 = arith.constant 0 : index
      %c0_30 = arith.constant 0 : index
      %31 = vector.load %arg7[%c0_29, %c0_30] : memref<4x1xf32, #tpu.memory_space<vmem>>, vector<4x1xf32>
      tpu.vector_store %arg7[%c0_29, %c0_30], %30 {strides = array<i32>} : memref<4x1xf32, #tpu.memory_space<vmem>>, vector<4x1xf32>,
    } else {
    }
    %c0 = arith.constant 0 : index
    %c0_1 = arith.constant 0 : index
    %c0_2 = arith.constant 0 : index
    %3 = vector.load %arg2[%c0, %c0_1, %c0_2] : memref<1x4x256xf32, #tpu.memory_space<vmem>>, vector<1x4x256xf32>
    %4 = vector.shape_cast %3 : vector<1x4x256xf32> to vector<4x256xf32>
    %c0_3 = arith.constant 0 : index
    %c0_4 = arith.constant 0 : index
    %c0_5 = arith.constant 0 : index
    %5 = vector.load %arg3[%c0_3, %c0_4, %c0_5] : memref<1x4x256xf32, #tpu.memory_space<vmem>>, vector<1x4x256xf32>
    %6 = vector.shape_cast %5 : vector<1x4x256xf32> to vector<4x256xf32>
    %c0_6 = arith.constant 0 : index
    %c0_7 = arith.constant 0 : index
    %7 = vector.load %arg5[%c0_6, %c0_7] : memref<4x1xf32, #tpu.memory_space<vmem>>, vector<4x1xf32>
    %8 = arith.mulf %4, %6 : vector<4x256xf32>
    %cst = arith.constant dense<0.000000e+00> : vector<4xf32>
    %9 = vector.multi_reduction <add>, %8, %cst [1] : vector<4x256xf32> to vector<4xf32>
    %10 = vector.shape_cast %9 : vector<4xf32> to vector<4x1xf32>
    %11 = arith.addf %7, %10 : vector<4x1xf32>
    %c0_8 = arith.constant 0 : index
    %c0_9 = arith.constant 0 : index
    %12 = vector.load %arg5[%c0_8, %c0_9] : memref<4x1xf32, #tpu.memory_space<vmem>>, vector<4x1xf32>
    tpu.vector_store %arg5[%c0_8, %c0_9], %11 {strides = array<i32>} : memref<4x1xf32, #tpu.memory_space<vmem>>, vector<4x1xf32>,
    %c0_10 = arith.constant 0 : index
    %c0_11 = arith.constant 0 : index
    %13 = vector.load %arg6[%c0_10, %c0_11] : memref<4x1xf32, #tpu.memory_space<vmem>>, vector<4x1xf32>
    %cst_12 = arith.constant dense<0.000000e+00> : vector<4xf32>
    %14 = vector.multi_reduction <add>, %4, %cst_12 [1] : vector<4x256xf32> to vector<4xf32>
    %15 = vector.shape_cast %14 : vector<4xf32> to vector<4x1xf32>
    %16 = arith.addf %13, %15 : vector<4x1xf32>
    %c0_13 = arith.constant 0 : index
    %c0_14 = arith.constant 0 : index
    %17 = vector.load %arg6[%c0_13, %c0_14] : memref<4x1xf32, #tpu.memory_space<vmem>>, vector<4x1xf32>
    tpu.vector_store %arg6[%c0_13, %c0_14], %16 {strides = array<i32>} : memref<4x1xf32, #tpu.memory_space<vmem>>, vector<4x1xf32>,
    %c0_15 = arith.constant 0 : index
    %c0_16 = arith.constant 0 : index
    %18 = vector.load %arg7[%c0_15, %c0_16] : memref<4x1xf32, #tpu.memory_space<vmem>>, vector<4x1xf32>
    %cst_17 = arith.constant dense<0.000000e+00> : vector<4xf32>
    %19 = vector.multi_reduction <add>, %6, %cst_17 [1] : vector<4x256xf32> to vector<4xf32>
    %20 = vector.shape_cast %19 : vector<4xf32> to vector<4x1xf32>
    %21 = arith.addf %18, %20 : vector<4x1xf32>
    %c0_18 = arith.constant 0 : index
    %c0_19 = arith.constant 0 : index
    %22 = vector.load %arg7[%c0_18, %c0_19] : memref<4x1xf32, #tpu.memory_space<vmem>>, vector<4x1xf32>
    tpu.vector_store %arg7[%c0_18, %c0_19], %21 {strides = array<i32>} : memref<4x1xf32, #tpu.memory_space<vmem>>, vector<4x1xf32>,
    %c0_i32_20 = arith.constant 0 : i32
    %23 = arith.cmpi eq, %arg1, %c0_i32_20 : i32
    %24 = arith.extui %23 : i1 to i32
    %c0_i32_21 = arith.constant 0 : i32
    %25 = arith.cmpi ne, %24, %c0_i32_21 : i32
    scf.if %25 {
      %c0_22 = arith.constant 0 : index
      %c0_23 = arith.constant 0 : index
      %26 = vector.load %arg5[%c0_22, %c0_23] : memref<4x1xf32, #tpu.memory_space<vmem>>, vector<4x1xf32>
      %c0_24 = arith.constant 0 : index
      %c0_25 = arith.constant 0 : index
      %c0_26 = arith.constant 0 : index
      %27 = vector.load %arg4[%c0_24, %c0_25, %c0_26] : memref<1x4x3xf32, #tpu.memory_space<vmem>>, vector<1x4x1xf32>
      %28 = vector.shape_cast %27 : vector<1x4x1xf32> to vector<4x1xf32>
      %29 = vector.shape_cast %26 : vector<4x1xf32> to vector<1x4x1xf32>
      tpu.vector_store %arg4[%c0_24, %c0_25, %c0_26], %29 {strides = array<i32>} : memref<1x4x3xf32, #tpu.memory_space<vmem>>, vector<1x4x1xf32>,
      %c0_27 = arith.constant 0 : index
      %c0_28 = arith.constant 0 : index
      %30 = vector.load %arg6[%c0_27, %c0_28] : memref<4x1xf32, #tpu.memory_space<vmem>>, vector<4x1xf32>
      %c0_29 = arith.constant 0 : index
      %c0_30 = arith.constant 0 : index
      %c1 = arith.constant 1 : index
      %31 = vector.load %arg4[%c0_29, %c0_30, %c1] : memref<1x4x3xf32, #tpu.memory_space<vmem>>, vector<1x4x1xf32>
      %32 = vector.shape_cast %31 : vector<1x4x1xf32> to vector<4x1xf32>
      %33 = vector.shape_cast %30 : vector<4x1xf32> to vector<1x4x1xf32>
      tpu.vector_store %arg4[%c0_29, %c0_30, %c1], %33 {strides = array<i32>} : memref<1x4x3xf32, #tpu.memory_space<vmem>>, vector<1x4x1xf32>,
      %c0_31 = arith.constant 0 : index
      %c0_32 = arith.constant 0 : index
      %34 = vector.load %arg7[%c0_31, %c0_32] : memref<4x1xf32, #tpu.memory_space<vmem>>, vector<4x1xf32>
      %c0_33 = arith.constant 0 : index
      %c0_34 = arith.constant 0 : index
      %c2 = arith.constant 2 : index
      %35 = vector.load %arg4[%c0_33, %c0_34, %c2] : memref<1x4x3xf32, #tpu.memory_space<vmem>>, vector<1x4x1xf32>
      %36 = vector.shape_cast %35 : vector<1x4x1xf32> to vector<4x1xf32>
      %37 = vector.shape_cast %34 : vector<4x1xf32> to vector<1x4x1xf32>
      tpu.vector_store %arg4[%c0_33, %c0_34, %c2], %37 {strides = array<i32>} : memref<1x4x3xf32, #tpu.memory_space<vmem>>, vector<1x4x1xf32>,
    } else {
    }
    return
  }
  func.func @transform_0(%arg0: i32, %arg1: i32) -> (i32, i32, i32) {
    %c0_i32 = arith.constant 0 : i32
    %c0_i32_0 = arith.constant 0 : i32
    return %arg0, %c0_i32, %arg1 : i32, i32, i32
  }
  func.func @transform_1(%arg0: i32, %arg1: i32) -> (i32, i32, i32) {
    %c0_i32 = arith.constant 0 : i32
    %c0_i32_0 = arith.constant 0 : i32
    return %arg0, %c0_i32, %arg1 : i32, i32, i32
  }
  func.func @transform_2(%arg0: i32, %arg1: i32) -> (i32, i32, i32) {
    %c0_i32 = arith.constant 0 : i32
    %c0_i32_0 = arith.constant 0 : i32
    %c0_i32_1 = arith.constant 0 : i32
    return %arg0, %c0_i32, %c0_i32_0 : i32, i32, i32
  }
}

</mosaic_0001>

<llo_original>
// kernel: tpu_custom_call.1
$region0: #{tpu_custom_call.1}
  #allocation0 [shape = 'u32[]', space=smem, size = 0x4, offset = 0x4, fixed_abs, tag = 'smem constant byte address 0x4 - core index']
  #allocation1 [shape = 'u32[144,128]{1,0:T(1,128)}', space=vmem, size = 0x12000, scoped, tag = 'internal scratch']
  #allocation2 [shape = 'f32[4,1]{1,0:T(4,128)}', space=vmem, size = 0x800, scoped, tag = 'scratch operand']
  #allocation3 [shape = 'f32[4,1]{1,0:T(4,128)}', space=vmem, size = 0x800, scoped, tag = 'scratch operand']
  #allocation4 [shape = 'f32[4,1]{1,0:T(4,128)}', space=vmem, size = 0x800, scoped, tag = 'scratch operand']
  %s0 = inlined_call_operand.hbm [shape: f32[2,4,256], index: 0, kind: input, shape index: {}]
  %s1 = inlined_call_operand.hbm [shape: f32[2,4,256], index: 1, kind: input, shape index: {}]
  %s2 = inlined_call_operand.vmem [shape: f32[2,4,3], index: 2, kind: output, shape index: {}]
  %s3 = sld [smem:[#allocation0]]
  $region57: #{tpu_custom_call.1} parent=0
    _
  %s5 = ssub.s32 1, %s3
  %s6 = scalar_select 0, %s5, %s3
  $region1: #{tpu_custom_call.1} parent=0
    #allocation5 [shape = 'u8[8192]{0}', space=vmem, size = 0x2000, scoped, tag = 'input window, operand 0']
    #allocation6 [shape = 's32[2]{0}', space=sflag, size = 0x8, scoped, tag = 'scoped memory for tpu_custom_call.1']
    #allocation7 [shape = 'u8[8192]{0}', space=vmem, size = 0x2000, scoped, tag = 'input window, operand 1']
    #allocation8 [shape = 's32[2]{0}', space=sflag, size = 0x8, scoped, tag = 'scoped memory for tpu_custom_call.1']
    %7 = vsyncpa [#allocation6], 0
    %s8 = scalar_lea.sflag [#allocation6], 1
    %9 = vsyncpa %s8, 0
    %10 = vsyncpa [#allocation8], 0
    %s11 = scalar_lea.sflag [#allocation8], 1
    %12 = vsyncpa %s11, 0
    loop: start=0, step=1, limit=4
    $region2: #{tpu_custom_call.1} parent=1 // loop_pre_header
      _
    $region3: #{tpu_custom_call.1} parent=1 // loop_header
      %s14 = sphi 0, %s18
      %p15 = scmp.ge.s32.totalorder %s14, 4
      %s21 = sphi 0, %s33
      %s22 = sphi 0, %s29
      %s23 = sphi 0, %s21
      %s24 = sphi 0, %s22
      %s25 = sphi 0, %s23
      %s26 = sphi 0, %s24
      %s38 = sphi 0, %s40
      %s41 = sphi 0, %s38
      %s42 = sphi 0, %s41
      %s58 = sphi 0, %s42
      %s66 = sphi 0, %s68
      %s69 = sphi 0, %s66
      %s70 = sphi 0, %s69
      %s86 = sphi 0, %s70
      %s92 = sphi 0, %s94
      %s95 = sphi 0, %s92
      %s96 = sphi 0, %s95
      %s112 = sphi 0, %s96
    $region4: #{tpu_custom_call.1} parent=1 // loop_header_branch
      %17 = sbr.rel (%p15) target = $region8
    $region5: #{tpu_custom_call.1} parent=1 // loop_body
      %s19 = ssub.s32 %s14, 1
      %s20 = ssub.s32 %s14, 2
      %s27 = sadd.s32 1, %s22
      %p28 = scmp.ge.s32.totalorder %s27, 1
      %s29 = scalar_select %p28, 0, %s27
      %s30 = sadd.s32 1, %s21
      %s31 = scalar_select %p28, %s30, %s21
      %p32 = scmp.ge.s32.totalorder %s31, 2
      %s33 = scalar_select %p32, 0, %s31
      %s34 = ssub.s32 %s21, %s33
      %s35 = ssub.s32 %s22, %s29
      %s36 = sor.u32 %s34, %s35
      %p37 = scmp.eq.s32.totalorder %s36, 0
      %s39 = sadd.s32 %s38, 1
      %s40 = scalar_select %p37, %s38, %s39
      %p43 = pneg %p37
      %p44 = scmp.eq.s32.totalorder %s14, 1
      %p45 = por %p43, %p44
      %p46 = scmp.ne.s32.totalorder %s38, %s41
      %p47 = scmp.eq.s32.totalorder %s14, 0
      %p48 = por %p46, %p47
      %p49 = scmp.ne.s32.totalorder %s38, %s41
      %p50 = scmp.eq.s32.totalorder %s19, 1
      %p51 = por %p49, %p50
      %p52 = scmp.ne.s32.totalorder %s41, %s42
      %p53 = scmp.eq.s32.totalorder %s19, 0
      %p54 = por %p52, %p53
      %p55 = scmp.ne.s32.totalorder %s41, %s42
      %p56 = scmp.eq.s32.totalorder %s20, 1
      %p57 = por %p55, %p56
      %p59 = scmp.ne.s32.totalorder %s42, %s58
      %p60 = scmp.eq.s32.totalorder %s20, 0
      %p61 = por %p59, %p60
      %s62 = ssub.s32 %s21, %s33
      %s63 = ssub.s32 %s22, %s29
      %s64 = sor.u32 %s62, %s63
      %p65 = scmp.eq.s32.totalorder %s64, 0
      %s67 = sadd.s32 %s66, 1
      %s68 = scalar_select %p65, %s66, %s67
      %p71 = pneg %p65
      %p72 = scmp.eq.s32.totalorder %s14, 1
      %p73 = por %p71, %p72
      %p74 = scmp.ne.s32.totalorder %s66, %s69
      %p75 = scmp.eq.s32.totalorder %s14, 0
      %p76 = por %p74, %p75
      %p77 = scmp.ne.s32.totalorder %s66, %s69
      %p78 = scmp.eq.s32.totalorder %s19, 1
      %p79 = por %p77, %p78
      %p80 = scmp.ne.s32.totalorder %s69, %s70
      %p81 = scmp.eq.s32.totalorder %s19, 0
      %p82 = por %p80, %p81
      %p83 = scmp.ne.s32.totalorder %s69, %s70
      %p84 = scmp.eq.s32.totalorder %s20, 1
      %p85 = por %p83, %p84
      %p87 = scmp.ne.s32.totalorder %s70, %s86
      %p88 = scmp.eq.s32.totalorder %s20, 0
      %p89 = por %p87, %p88
      %s90 = ssub.s32 %s21, %s33
      %p91 = scmp.eq.s32.totalorder %s90, 0
      %s93 = sadd.s32 %s92, 1
      %s94 = scalar_select %p91, %s92, %s93
      %p97 = pneg %p91
      %p98 = scmp.eq.s32.totalorder %s14, 1
      %p99 = por %p97, %p98
      %p100 = scmp.ne.s32.totalorder %s92, %s95
      %p101 = scmp.eq.s32.totalorder %s14, 0
      %p102 = por %p100, %p101
      %p103 = scmp.ne.s32.totalorder %s92, %s95
      %p104 = scmp.eq.s32.totalorder %s19, 1
      %p105 = por %p103, %p104
      %p106 = scmp.ne.s32.totalorder %s95, %s96
      %p107 = scmp.eq.s32.totalorder %s19, 0
      %p108 = por %p106, %p107
      %p109 = scmp.ne.s32.totalorder %s95, %s96
      %p110 = scmp.eq.s32.totalorder %s20, 1
      %p111 = por %p109, %p110
      %p113 = scmp.ne.s32.totalorder %s96, %s112
      %p114 = scmp.eq.s32.totalorder %s20, 0
      %p115 = por %p113, %p114
      %p116 = scmp.le.s32.totalorder 1, %s14
      %p117 = scmp.lt.s32.totalorder %s14, 3
      %p118 = pnand %p116, %p117
      %p119 = pneg %p118
      // Predicated region
      $region9: #{tpu_custom_call.1} parent=5 // pred_check
        _
      $region10: #{tpu_custom_call.1} parent=5 // pred_check_branch
        %121 = sbr.rel (%p118) target = $region12
      $region11: #{tpu_custom_call.1} parent=5 // pred_region
        %s122 = ssub.s32 %s14, 1
      $region12: #{tpu_custom_call.1} parent=5 // pred_fallthru
        _
      %p123 = scmp.lt.s32.totalorder %s14, 2
      // Predicated region
      $region13: #{tpu_custom_call.1} parent=5 // pred_check
        %p124 = pneg %p123
      $region14: #{tpu_custom_call.1} parent=5 // pred_check_branch
        %126 = sbr.rel (%p124) target = $region16
      $region15: #{tpu_custom_call.1} parent=5 // pred_region
        // Predicated region
        $region17: #{tpu_custom_call.1} parent=15 // pred_check
          %p127 = pneg %p48
        $region18: #{tpu_custom_call.1} parent=15 // pred_check_branch
          %129 = sbr.rel (%p127) target = $region20
        $region19: #{tpu_custom_call.1} parent=15 // pred_region
          %s130 = sand.u32 %s38, 1
          %s131 = scalar_lea.sflag [#allocation6], %s130
          %s132 = sand.u32 %s38, 1
          %s133 = smul.addr %s132, 8
          %s134 = scalar_lea.vmem [#allocation5], %s133
          %s135 = smul.u32 2, %s22
          %s137 = ssub.s32 128, 128
          %138 = vsyncadd %s131, %s137
          %s139 = smul.addr %s21, 2
          %s140 = sadd.s32 %s135, %s139
          %s141 = smul.addr %s140, 64
          %s142 = scalar_lea.hbm %s0, %s141
          %s144 = sshll.u32 %s134, 4
          %s145 = int_to_ptr.vmem [resolvable:$true] %s144
          %147 = dma.hbm_to_vmem [thread:$0]  %s142, 128, %s145, %s131
        $region20: #{tpu_custom_call.1} parent=15 // pred_fallthru
          _
        // Predicated region
        $region21: #{tpu_custom_call.1} parent=15 // pred_check
          %p148 = pneg %p76
        $region22: #{tpu_custom_call.1} parent=15 // pred_check_branch
          %150 = sbr.rel (%p148) target = $region24
        $region23: #{tpu_custom_call.1} parent=15 // pred_region
          %s151 = sand.u32 %s66, 1
          %s152 = scalar_lea.sflag [#allocation8], %s151
          %s153 = sand.u32 %s66, 1
          %s154 = smul.addr %s153, 8
          %s155 = scalar_lea.vmem [#allocation7], %s154
          %s156 = smul.u32 2, %s22
          %s158 = ssub.s32 128, 128
          %159 = vsyncadd %s152, %s158
          %s160 = smul.addr %s21, 2
          %s161 = sadd.s32 %s156, %s160
          %s162 = smul.addr %s161, 64
          %s163 = scalar_lea.hbm %s1, %s162
          %s165 = sshll.u32 %s155, 4
          %s166 = int_to_ptr.vmem [resolvable:$true] %s165
          %168 = dma.hbm_to_vmem [thread:$0]  %s163, 128, %s166, %s152
        $region24: #{tpu_custom_call.1} parent=15 // pred_fallthru
          _
      $region16: #{tpu_custom_call.1} parent=5 // pred_fallthru
        _
      %p169 = scmp.le.s32.totalorder 1, %s14
      %p170 = scmp.lt.s32.totalorder %s14, 3
      %p171 = pnand %p169, %p170
      %p172 = pneg %p171
      // Predicated region
      $region25: #{tpu_custom_call.1} parent=5 // pred_check
        _
      $region26: #{tpu_custom_call.1} parent=5 // pred_check_branch
        %174 = sbr.rel (%p171) target = $region28
      $region27: #{tpu_custom_call.1} parent=5 // pred_region
        %s175 = ssub.s32 %s14, 1
        %s176 = sand.u32 %s41, 1
        %s177 = scalar_lea.sflag [#allocation6], %s176
        %s178 = sand.u32 %s41, 1
        %s179 = smul.addr %s178, 8
        %s180 = scalar_lea.vmem [#allocation5], %s179
        // Predicated region
        $region29: #{tpu_custom_call.1} parent=27 // pred_check
          %p181 = pneg %p54
        $region30: #{tpu_custom_call.1} parent=27 // pred_check_branch
          %183 = sbr.rel (%p181) target = $region32
        $region31: #{tpu_custom_call.1} parent=27 // pred_region
          %184 = dma.done %s177, 128
        $region32: #{tpu_custom_call.1} parent=27 // pred_fallthru
          _
        %s185 = sand.u32 %s69, 1
        %s186 = scalar_lea.sflag [#allocation8], %s185
        %s187 = sand.u32 %s69, 1
        %s188 = smul.addr %s187, 8
        %s189 = scalar_lea.vmem [#allocation7], %s188
        // Predicated region
        $region33: #{tpu_custom_call.1} parent=27 // pred_check
          %p190 = pneg %p82
        $region34: #{tpu_custom_call.1} parent=27 // pred_check_branch
          %192 = sbr.rel (%p190) target = $region36
        $region35: #{tpu_custom_call.1} parent=27 // pred_region
          %193 = dma.done %s186, 128
        $region36: #{tpu_custom_call.1} parent=27 // pred_fallthru
          _
        %s194 = sand.u32 %s41, 1
        %s195 = scalar_lea.sflag [#allocation6], %s194
        %s196 = sand.u32 %s41, 1
        %s197 = smul.addr %s196, 8
        %s198 = scalar_lea.vmem [#allocation5], %s197
        %p199 = pneg %p54
        %p200 = pneg %p51
        %s201 = sand.u32 %s69, 1
        %s202 = scalar_lea.sflag [#allocation8], %s201
        %s203 = sand.u32 %s69, 1
        %s204 = smul.addr %s203, 8
        %s205 = scalar_lea.vmem [#allocation7], %s204
        %p206 = pneg %p82
        %p207 = pneg %p79
        %p208 = pneg %p108
        %p209 = pneg %p105
        %p210 = scmp.lt.s32.totalorder %s23, 1
        %s211 = scalar_select %p210, %s23, 1
        %s212 = smul.addr %s211, 4
        %s213 = scalar_lea.vmem %s2, %s212
        %s214 = smul.u32 2, %s24
        %s215 = smul.u32 2, %s24
        %p216 = scmp.lt.s32.totalorder %s23, 1
        %s217 = scalar_select %p216, %s23, 1
        %s218 = smul.addr %s217, 4
        %s219 = scalar_lea.vmem %s2, %s218
        %p220 = scmp.eq.s32.totalorder %s24, 0
        // Predicated region
        $region37: #{tpu_custom_call.1} parent=27 // pred_check
          %p221 = pneg %p220
        $region38: #{tpu_custom_call.1} parent=27 // pred_check_branch
          %223 = sbr.rel (%p221) target = $region40
        $region39: #{tpu_custom_call.1} parent=27 // pred_region
          %vm224 = vcmask 3072
          %225 = vst.msk [vmem:[#allocation2] sm:$0xf] %vm224, 0.0
          %226 = vst.msk [vmem:[#allocation3] sm:$0xf] %vm224, 0.0
          %227 = vst.msk [vmem:[#allocation4] sm:$0xf] %vm224, 0.0
        $region40: #{tpu_custom_call.1} parent=27 // pred_fallthru
          _
        %v228 = vld [vmem:[%s180] sm:$0xff]
        %v229 = vld [vmem:[%s189] sm:$0xff]
        %v230 = vld [vmem:[#allocation2] sm:$0xf]
        %v231 = vmul.f32 %v228, %v229
        %v233 = vcombine.high %v231, %v231
        %vm235 = vcmask 1043456
        %v236 = vsel %vm235, %v231, 0.0
        %v237 = vsel %vm235, %v233, 0.0
        %v238 = vadd.f32 %v236, %v237
        %239 = vadd.xlane.f32.xlu0 %v238
        %v240 = vpop.xlane.xlu0 %239
        %v241 = vadd.f32 %v230, %v240
        %vm242 = vcmask 3072
        %243 = vst.msk [vmem:[#allocation2] sm:$0xf] %vm242, %v241
        %v244 = vld [vmem:[#allocation3] sm:$0xf]
        %v246 = vcombine.high %v228, %v228
        %v248 = vsel %vm235, %v228, 0.0
        %v249 = vsel %vm235, %v246, 0.0
        %v250 = vadd.f32 %v248, %v249
        %251 = vadd.xlane.f32.xlu0 %v250
        %v252 = vpop.xlane.xlu0 %251
        %v253 = vadd.f32 %v244, %v252
        %254 = vst.msk [vmem:[#allocation3] sm:$0xf] %vm242, %v253
        %v255 = vld [vmem:[#allocation4] sm:$0xf]
        %v257 = vcombine.high %v229, %v229
        %v259 = vsel %vm235, %v229, 0.0
        %v260 = vsel %vm235, %v257, 0.0
        %v261 = vadd.f32 %v259, %v260
        %262 = vadd.xlane.f32.xlu0 %v261
        %v263 = vpop.xlane.xlu0 %262
        %v264 = vadd.f32 %v255, %v263
        %265 = vst.msk [vmem:[#allocation4] sm:$0xf] %vm242, %v264
        // Predicated region
        $region41: #{tpu_custom_call.1} parent=27 // pred_check
          %p266 = pneg %p220
        $region42: #{tpu_custom_call.1} parent=27 // pred_check_branch
          %268 = sbr.rel (%p266) target = $region44
        $region43: #{tpu_custom_call.1} parent=27 // pred_region
          %v269 = vld [vmem:[#allocation2] sm:$0xf]
          %270 = vst.msk [vmem:[%s219] sm:$0xf] %vm242, %v269
          %v271 = vld [vmem:[#allocation3] sm:$0xf]
          %273 = vrot.lane.b32.xlu0 %v271, 1
          %v274 = vpop.permute.xlu0 %273
          %vm276 = vcmask 11272
          %277 = vst.msk [vmem:[%s219] sm:$0xf] %vm276, %v274
          %v278 = vld [vmem:[#allocation4] sm:$0xf]
          %280 = vrot.lane.b32.xlu0 %v278, 2
          %v281 = vpop.permute.xlu0 %280
          %vm283 = vcmask 19472
          %284 = vst.msk [vmem:[%s219] sm:$0xf] %vm283, %v281
        $region44: #{tpu_custom_call.1} parent=27 // pred_fallthru
          _
        %p285 = scmp.lt.s32.totalorder %s23, 1
        %s286 = scalar_select %p285, %s23, 1
        %s287 = smul.addr %s286, 4
        %s288 = scalar_lea.vmem %s2, %s287
        // Predicated region
        $region45: #{tpu_custom_call.1} parent=27 // pred_check
          %p289 = pneg %p105
        $region46: #{tpu_custom_call.1} parent=27 // pred_check_branch
          %291 = sbr.rel (%p289) target = $region48
        $region47: #{tpu_custom_call.1} parent=27 // pred_region
          _
        $region48: #{tpu_custom_call.1} parent=27 // pred_fallthru
          _
      $region28: #{tpu_custom_call.1} parent=5 // pred_fallthru
        _
      %p292 = scmp.le.s32.totalorder 2, %s14
      // Predicated region
      $region49: #{tpu_custom_call.1} parent=5 // pred_check
        %p293 = pneg %p292
      $region50: #{tpu_custom_call.1} parent=5 // pred_check_branch
        %295 = sbr.rel (%p293) target = $region52
      $region51: #{tpu_custom_call.1} parent=5 // pred_region
        %s296 = ssub.s32 %s14, 2
        // Predicated region
        $region53: #{tpu_custom_call.1} parent=51 // pred_check
          %p297 = pneg %p111
        $region54: #{tpu_custom_call.1} parent=51 // pred_check_branch
          %299 = sbr.rel (%p297) target = $region56
        $region55: #{tpu_custom_call.1} parent=51 // pred_region
          %p300 = scmp.lt.s32.totalorder %s25, 1
          %s301 = scalar_select %p300, %s25, 1
          %s302 = smul.addr %s301, 4
          %s303 = scalar_lea.vmem %s2, %s302
        $region56: #{tpu_custom_call.1} parent=51 // pred_fallthru
          _
      $region52: #{tpu_custom_call.1} parent=5 // pred_fallthru
        _
    $region6: #{tpu_custom_call.1} parent=1 // loop_footer
      %s18 = sadd.s32 1, %s14
    $region7: #{tpu_custom_call.1} parent=1 // loop_footer_branch
      %13 = sbr.rel target = $region3
    $region8: #{tpu_custom_call.1} parent=1 // loop_exit
      _
    %304 = vsyncpa [#allocation6], 1
    %s305 = scalar_lea.sflag [#allocation6], 1
    %306 = vsyncpa %s305, 1
    %307 = vsyncpa [#allocation8], 1
    %s308 = scalar_lea.sflag [#allocation8], 1
    %309 = vsyncpa %s308, 1

</llo_original>
